<compile_context>
chip_gen: v5e
topology: v5e:2x2
jax: 0.10.0
libtpu: 0.0.40
codegen_flags: <defaults>
</compile_context>

<pallas_src>
import functools

import jax
import jax.numpy as jnp
from jax.experimental import pallas as pl
from jax.experimental.pallas import tpu as pltpu


# --------------------------------------------------------------------------
# pltpu.roll convention: detected once, memoized.
#   sign == -1  ->  pltpu.roll matches jnp.roll (out[j] = in[j - shift])
# --------------------------------------------------------------------------
def _roll_probe_kernel(x_ref, o_ref):
    o_ref[...] = pltpu.roll(x_ref[...], shift=1, axis=1)


_ROLL_SIGN = None


def get_roll_sign():
    global _ROLL_SIGN
    if _ROLL_SIGN is None:
        x = jnp.tile(jnp.arange(128, dtype=jnp.float32)[None, :], (8, 1))
        y = pl.pallas_call(
            _roll_probe_kernel,
            out_shape=jax.ShapeDtypeStruct((8, 128), jnp.float32),
        )(x)
        _ROLL_SIGN = -1 if abs(float(y[0, 1])) < 0.5 else 1
    return _ROLL_SIGN


# --------------------------------------------------------------------------
# the single fused UNet kernel
# --------------------------------------------------------------------------
def _unet_kernel(*refs, names, dims, roll_sign, eps=1e-5):
    r = dict(zip(names, refs))          # zip stops at len(names) -> inputs only
    out_ref = refs[len(names)]
    d = dims

    # ---------------- helpers ----------------
    def shift_src(x, k, Mp):
        """y[:, c] = x[:, (c + k) % Mp]  (circular lane shift)."""
        if k % Mp == 0:
            return x
        return pltpu.roll(x, shift=(roll_sign * k) % Mp, axis=1)

    def make_level(H, W, M, Mp):
        col = jax.lax.broadcasted_iota(jnp.int32, (1, Mp), 1)
        if (W & (W - 1)) == 0 and (H & (H - 1)) == 0:   # powers of two: bit ops
            ww = col & (W - 1)
            hh = (col >> (W.bit_length() - 1)) & (H - 1)
        else:
            ww = col % W
            hh = (col // W) % H
        taps = []
        for dh in (-1, 0, 1):
            for dw in (-1, 0, 1):
                k = dh * W + dw
                if dh == 0 and dw == 0:
                    taps.append((k, None))
                else:
                    ok = ((hh + dh >= 0) & (hh + dh < H) &
                          (ww + dw >= 0) & (ww + dw < W))
                    taps.append((k, ok.astype(jnp.float32)))
        colf = None if M == Mp else (col < M).astype(jnp.float32)
        return dict(H=H, W=W, M=M, Mp=Mp, taps=taps, colf=colf)

    def conv3x3(inp, w_ref, lvl):
        """w_ref: (9, Co, Ci); inp: (Ci, Mp).  No bias (added by caller)."""
        Co, Ci, Mp = w_ref.shape[1], inp.shape[0], lvl["Mp"]
        acc = jnp.zeros((Co, Mp), jnp.float32)
        for t, (k, m) in enumerate(lvl["taps"]):
            s = shift_src(inp, k, Mp)
            if m is None:
                acc = acc + jnp.dot(w_ref[t], s,
                                    preferred_element_type=jnp.float32)
            elif Co < Ci:   # cheaper to mask the (Co, Mp) product
                acc = acc + jnp.dot(w_ref[t], s,
                                    preferred_element_type=jnp.float32) * m
            else:           # cheaper to mask the (Ci, Mp) operand
                acc = acc + jnp.dot(w_ref[t], s * m,
                                    preferred_element_type=jnp.float32)
        return acc

    def bn(y, g, be, lvl):
        """Single-pass training-mode BatchNorm (biased variance)."""
        minv = 1.0 / lvl["M"]
        if lvl["colf"] is None:
            s1 = jnp.sum(y, axis=1, keepdims=True)
            s2 = jnp.sum(y * y, axis=1, keepdims=True)
        else:
            ym = y * lvl["colf"]
            s1 = jnp.sum(ym, axis=1, keepdims=True)
            s2 = jnp.sum(ym * y, axis=1, keepdims=True)
        mean = s1 * minv
        var = s2 * minv - mean * mean
        scale = g * jax.lax.rsqrt(var + eps)
        return y * scale + (be - mean * scale)

    def res_block(parts, w1_names, wr_names, w2_name, vec_name, lvl, relu_res):
        """conv3x3->ReLU->BN->conv3x3->ReLU->BN  +  conv1x1->(ReLU)->BN.
        `parts` may hold several Cin slices (decoder concat without concat)."""
        w2_ref = r[w2_name]
        Co = w2_ref.shape[1]
        vec = r[vec_name]

        def V(i):
            return vec[i * Co:(i + 1) * Co, :]

        b1, g1, be1, b2, g2, be2, br_, gr_, ber_ = (V(i) for i in range(9))

        h = None
        for part, wn in zip(parts, w1_names):
            c = conv3x3(part, r[wn], lvl)
            h = c if h is None else h + c
        h = bn(jnp.maximum(h + b1, 0.0), g1, be1, lvl)
        h = conv3x3(h, w2_ref, lvl)
        h = bn(jnp.maximum(h + b2, 0.0), g2, be2, lvl)

        res = None
        for part, wn in zip(parts, wr_names):
            c = jnp.dot(r[wn][...], part, preferred_element_type=jnp.float32)
            res = c if res is None else res + c
        res = res + br_
        if relu_res:
            res = jnp.maximum(res, 0.0)
        res = bn(res, gr_, ber_, lvl)
        return h + res

    def maxpool2x2(x, lvl, sel_name):
        """max over the 2x2 window via 3 lane-rolls, then select the even
        (2h,2w) columns with a precomputed 0/1 matrix (one MXU matmul)."""
        W, Mp = lvl["W"], lvl["Mp"]
        m = jnp.maximum(jnp.maximum(x, shift_src(x, 1, Mp)),
                        jnp.maximum(shift_src(x, W, Mp),
                                    shift_src(x, W + 1, Mp)))
        return jnp.dot(m, r[sel_name][...], preferred_element_type=jnp.float32)

    def conv_transpose2x2(x, w_name, b_name, scat_name, lvl_fine):
        """ConvTranspose2d(k=2, s=2): one matmul -> scatter to (2h,2w) via a
        precomputed 0/1 matrix -> lane-roll each (kh,kw) group into place."""
        wT = r[w_name][...]                                   # (4*Co, Ci)
        Co = wT.shape[0] // 4
        z = jnp.dot(wT, x, preferred_element_type=jnp.float32)
        scat = r[scat_name][...]
        Wf, Mpf = lvl_fine["W"], lvl_fine["Mp"]
        out = None
        for g, (kh, kw) in enumerate(((0, 0), (0, 1), (1, 0), (1, 1))):
            base = jnp.dot(z[g * Co:(g + 1) * Co, :], scat,
                           preferred_element_type=jnp.float32)
            off = kh * Wf + kw
            moved = base if off == 0 else shift_src(base, -off, Mpf)
            out = moved if out is None else out + moved
        return out + r[b_name][...]

    # ---------------- forward ----------------
    L0 = make_level(d["H0"], d["W0"], d["M0"], d["Mp0"])
    L1 = make_level(d["H1"], d["W1"], d["M1"], d["Mp1"])
    L2 = make_level(d["H2"], d["W2"], d["M2"], d["Mp2"])

    x = r["x"][...]

    # encoder level 0 (+ conv_bridge2)
    out_first = res_block([x], ["fst_w1"], ["fst_wr"], "fst_w2", "fst_vec",
                          L0, relu_res=True)
    bridge2 = (jnp.dot(r["br2_w"][...], out_first,
                       preferred_element_type=jnp.float32) + r["br2_b"][...])

    # encoder level 1 (+ conv_bridge1)
    p1 = maxpool2x2(out_first, L0, "pool0")
    out_block1 = res_block([p1], ["b1_w1"], ["b1_wr"], "b1_w2", "b1_vec",
                           L1, relu_res=False)
    bridge1 = (jnp.dot(r["br1_w"][...], out_block1,
                       preferred_element_type=jnp.float32) + r["br1_b"][...])

    # bottleneck (level 2)
    p2 = maxpool2x2(out_block1, L1, "pool1")
    out_block2 = res_block([p2], ["b2_w1"], ["b2_wr"], "b2_w2", "b2_vec",
                           L2, relu_res=False)

    # decoder level 1 (concat replaced by Cin-split weights)
    up1 = conv_transpose2x2(out_block2, "uT1_w", "uT1_b", "scat1", L1)
    out_up1 = res_block([up1, bridge1], ["u1_w1a", "u1_w1b"],
                        ["u1_wra", "u1_wrb"], "u1_w2", "u1_vec",
                        L1, relu_res=False)

    # decoder level 0
    up2 = conv_transpose2x2(out_up1, "uT2_w", "uT2_b", "scat0", L0)
    out_up2 = res_block([up2, bridge2], ["u2_w1a", "u2_w1b"],
                        ["u2_wra", "u2_wrb"], "u2_w2", "u2_vec",
                        L0, relu_res=False)

    # final 1x1 conv
    out_ref[...] = (jnp.dot(r["fin_w"][...], out_up2,
                            preferred_element_type=jnp.float32)
                    + r["fin_b"][...])


# --------------------------------------------------------------------------
# one-time parameter re-layout (PyTorch layouts -> kernel layouts) plus the
# per-geometry pool-selection / pixel-shuffle-scatter matrices.
# --------------------------------------------------------------------------
def prepare_params(p, N, H0, W0):
    H1, W1 = H0 // 2, W0 // 2
    H2, W2 = H1 // 2, W1 // 2

    def m_mp(H, W):
        M = N * H * W
        return M, ((M + 127) // 128) * 128

    M0, Mp0 = m_mp(H0, W0)
    M1, Mp1 = m_mp(H1, W1)
    M2, Mp2 = m_mp(H2, W2)

    def conv3_w(c):                      # (Co, Ci, 3, 3) -> (9, Co, Ci)
        w = jnp.transpose(c["w"], (2, 3, 0, 1))
        return w.reshape(9, w.shape[2], w.shape[3])

    def conv1_w(c):                      # (Co, Ci, 1, 1) -> (Co, Ci)
        return c["w"].reshape(c["w"].shape[0], c["w"].shape[1])

    def block_arrays(prefix, res_name, conv_name, split=None):
        c1, c2, res = p[conv_name][0], p[conv_name][1], p[res_name]
        vec = jnp.concatenate([
            c1["conv"]["b"], c1["bn"]["g"], c1["bn"]["b"],
            c2["conv"]["b"], c2["bn"]["g"], c2["bn"]["b"],
            res["conv"]["b"], res["bn"]["g"], res["bn"]["b"]]).reshape(-1, 1)
        w1, w2, wr = conv3_w(c1["conv"]), conv3_w(c2["conv"]), conv1_w(res["conv"])
        out = {prefix + "_w2": w2, prefix + "_vec": vec}
        if split is None:
            out[prefix + "_w1"] = w1
            out[prefix + "_wr"] = wr
        else:                            # concat([up, bridge]) -> two weights
            out[prefix + "_w1a"] = w1[:, :, :split]
            out[prefix + "_w1b"] = w1[:, :, split:]
            out[prefix + "_wra"] = wr[:, :split]
            out[prefix + "_wrb"] = wr[:, split:]
        return out

    def convT_arrays(prefix, name):      # (Ci, Co, 2, 2) -> (4*Co, Ci)
        w = jnp.transpose(p[name]["w"], (2, 3, 1, 0))
        co = w.shape[2]
        return {prefix + "_w": w.reshape(4 * co, w.shape[3]),
                prefix + "_b": p[name]["b"].reshape(-1, 1)}

    def conv1_arrays(prefix, name):
        return {prefix + "_w": conv1_w(p[name]),
                prefix + "_b": p[name]["b"].reshape(-1, 1)}

    def scatter_base(Hc, Wc, Mpc, Hf, Wf, Mpf):
        """0/1 matrix: coarse column (n,h,w) -> fine column (n,2h,2w)."""
        Mc = N * Hc * Wc
        rows = jnp.arange(Mc)
        n = rows // (Hc * Wc)
        h = (rows // Wc) % Hc
        w = rows % Wc
        cols = n * (Hf * Wf) + (2 * h) * Wf + 2 * w
        return jnp.zeros((Mpc, Mpf), jnp.float32).at[rows, cols].set(1.0)

    scat0 = scatter_base(H1, W1, Mp1, H0, W0, Mp0)   # level1 -> level0
    scat1 = scatter_base(H2, W2, Mp2, H1, W1, Mp1)   # level2 -> level1

    C2 = p["conv_bridge1"]["w"].shape[0]             # up-channels at level 1
    C1 = p["conv_bridge2"]["w"].shape[0]             # up-channels at level 0

    arrays = {}
    arrays["pool0"] = scat0.T                         # (Mp0, Mp1) selection
    arrays["pool1"] = scat1.T                         # (Mp1, Mp2) selection
    arrays["scat1"] = scat1
    arrays["scat0"] = scat0
    arrays.update(block_arrays("fst", "first_residual", "first_conv"))
    arrays.update(block_arrays("b1", "block1_residual", "block1_conv"))
    arrays.update(block_arrays("b2", "block2_residual", "block2_conv"))
    arrays.update(block_arrays("u1", "up_block1_residual", "up_block1_conv", split=C2))
    arrays.update(block_arrays("u2", "up_block2_residual", "up_block2_conv", split=C1))
    arrays.update(conv1_arrays("br2", "conv_bridge2"))
    arrays.update(conv1_arrays("br1", "conv_bridge1"))
    arrays.update(convT_arrays("uT1", "up_layer1"))
    arrays.update(convT_arrays("uT2", "up_layer2"))
    arrays.update(conv1_arrays("fin", "conv_final"))

    dims = dict(H0=H0, W0=W0, M0=M0, Mp0=Mp0,
                H1=H1, W1=W1, M1=M1, Mp1=Mp1,
                H2=H2, W2=W2, M2=M2, Mp2=Mp2)
    return {"arrays": arrays, "order": tuple(arrays.keys()), "dims": dims,
            "c_out": p["conv_final"]["w"].shape[0]}


# --------------------------------------------------------------------------
# Pallas UNet forward: ONE fused pallas_call (+ two tiny layout transposes)
# --------------------------------------------------------------------------
def unet_forward_pallas(x_nchw, prepared, roll_sign):
    d = prepared["dims"]
    arrays = prepared["arrays"]
    order = prepared["order"]
    c_out = prepared["c_out"]

    N, C_in, H, W = x_nchw.shape
    assert (H, W) == (d["H0"], d["W0"]) and N * H * W == d["M0"]

    x_cm = jnp.transpose(x_nchw.astype(jnp.float32),
                         (1, 0, 2, 3)).reshape(C_in, d["M0"])
    if d["Mp0"] != d["M0"]:
        x_cm = jnp.pad(x_cm, ((0, 0), (0, d["Mp0"] - d["M0"])))

    inputs = [x_cm] + [arrays[k] for k in order]
    names = ("x",) + order

    kern = functools.partial(_unet_kernel, names=names, dims=d,
                             roll_sign=roll_sign)
    vmem = pl.BlockSpec(memory_space=pltpu.MemorySpace.VMEM)
    out_cm = pl.pallas_call(
        kern,
        out_shape=jax.ShapeDtypeStruct((c_out, d["Mp0"]), jnp.float32),
        in_specs=[vmem] * len(inputs),
        out_specs=vmem,
    )(*inputs)

    out_cm = out_cm[:, :d["M0"]]
    return jnp.transpose(out_cm.reshape(c_out, N, H, W), (1, 0, 2, 3))


# --------------------------------------------------------------------------
# deterministic parameter init (PyTorch layouts)
# --------------------------------------------------------------------------
def init_params(key):
    keys = iter(jax.random.split(key, 128))

    def conv(cin, cout, k, pad):
        scale = 1.0 / jnp.sqrt(cin * k * k)
        w = jax.random.normal(next(keys), (cout, cin, k, k), jnp.float32) * scale
        b = jax.random.normal(next(keys), (cout,), jnp.float32) * 0.05
        return {"w": w, "b": b, "pad": pad}

    def convT(cin, cout):
        scale = 1.0 / jnp.sqrt(cin * 4)
        w = jax.random.normal(next(keys), (cin, cout, 2, 2), jnp.float32) * scale
        b = jax.random.normal(next(keys), (cout,), jnp.float32) * 0.05
        return {"w": w, "b": b}

    def bn(c):
        g = 1.0 + 0.1 * jax.random.normal(next(keys), (c,), jnp.float32)
        b = 0.1 * jax.random.normal(next(keys), (c,), jnp.float32)
        return {"g": g, "b": b}

    C_in, C1, C2, C3, C_out = 4, 8, 16, 32, 2
    return {
        "first_residual": {"conv": conv(C_in, C1, 1, 0), "bn": bn(C1)},
        "first_conv": [{"conv": conv(C_in, C1, 3, 1), "bn": bn(C1)},
                       {"conv": conv(C1, C1, 3, 1), "bn": bn(C1)}],
        "block1_residual": {"conv": conv(C1, C2, 1, 0), "bn": bn(C2)},
        "block1_conv": [{"conv": conv(C1, C2, 3, 1), "bn": bn(C2)},
                        {"conv": conv(C2, C2, 3, 1), "bn": bn(C2)}],
        "block2_residual": {"conv": conv(C2, C3, 1, 0), "bn": bn(C3)},
        "block2_conv": [{"conv": conv(C2, C3, 3, 1), "bn": bn(C3)},
                        {"conv": conv(C3, C3, 3, 1), "bn": bn(C3)}],
        "up_layer1": convT(C3, C2),
        "conv_bridge1": conv(C2, C2, 1, 0),
        "up_block1_residual": {"conv": conv(2 * C2, C2, 1, 0), "bn": bn(C2)},
        "up_block1_conv": [{"conv": conv(2 * C2, C2, 3, 1), "bn": bn(C2)},
                           {"conv": conv(C2, C2, 3, 1), "bn": bn(C2)}],
        "up_layer2": convT(C2, C1),
        "conv_bridge2": conv(C1, C1, 1, 0),
        "up_block2_residual": {"conv": conv(2 * C1, C1, 1, 0), "bn": bn(C1)},
        "up_block2_conv": [{"conv": conv(2 * C1, C1, 3, 1), "bn": bn(C1)},
                           {"conv": conv(C1, C1, 3, 1), "bn": bn(C1)}],
        "conv_final": conv(C1, C_out, 1, 0),
    }


# --------------------------------------------------------------------------
# pure-JAX reference (same math, NHWC) for the correctness cross-check
# --------------------------------------------------------------------------
def _bn_ref(x, gamma, beta, eps=1e-5):
    mean = jnp.mean(x, axis=(0, 1, 2), keepdims=True)
    var = jnp.mean((x - mean) ** 2, axis=(0, 1, 2), keepdims=True)
    return (x - mean) * jax.lax.rsqrt(var + eps) * gamma + beta


def _conv_ref(x, c, relu):
    w, b, pad = c["w"], c["b"], c["pad"]
    N, H, W, Cin = x.shape
    Cout, _, KH, KW = w.shape
    xp = jnp.pad(x, ((0, 0), (pad, pad), (pad, pad), (0, 0))) if pad > 0 else x
    cols = [xp[:, kh:kh + H, kw:kw + W, :] for kh in range(KH) for kw in range(KW)]
    patches = jnp.concatenate(cols, axis=-1).reshape(N * H * W, KH * KW * Cin)
    wmat = jnp.transpose(w, (2, 3, 1, 0)).reshape(KH * KW * Cin, Cout)
    y = patches @ wmat + b[None, :]
    if relu:
        y = jnp.maximum(y, 0.0)
    return y.reshape(N, H, W, Cout)


def _convT_ref(x, c):
    w, b = c["w"], c["b"]
    N, H, W, Cin = x.shape
    Cout = w.shape[1]
    wmat = jnp.transpose(w, (0, 2, 3, 1)).reshape(Cin, 4 * Cout)
    y = x.reshape(N * H * W, Cin) @ wmat + jnp.tile(b, 4)[None, :]
    y = y.reshape(N, H, W, 2, 2, Cout)
    return jnp.transpose(y, (0, 1, 3, 2, 4, 5)).reshape(N, 2 * H, 2 * W, Cout)


def _pool_ref(x):
    return jnp.maximum(
        jnp.maximum(x[:, 0::2, 0::2, :], x[:, 0::2, 1::2, :]),
        jnp.maximum(x[:, 1::2, 0::2, :], x[:, 1::2, 1::2, :]))


def unet_forward_ref(x_nchw, p):
    def conv_bn(h, layer, relu):
        h = _conv_ref(h, layer["conv"], relu)
        return _bn_ref(h, layer["bn"]["g"], layer["bn"]["b"])

    def double_conv(h, layers):
        h = conv_bn(h, layers[0], relu=True)
        return conv_bn(h, layers[1], relu=True)

    x = jnp.transpose(x_nchw, (0, 2, 3, 1)).astype(jnp.float32)

    first_residual = conv_bn(x, p["first_residual"], relu=True)
    out_first = double_conv(x, p["first_conv"]) + first_residual

    pool1 = _pool_ref(out_first)
    out_block1 = double_conv(pool1, p["block1_conv"]) + conv_bn(pool1, p["block1_residual"], False)

    pool2 = _pool_ref(out_block1)
    out_block2 = double_conv(pool2, p["block2_conv"]) + conv_bn(pool2, p["block2_residual"], False)

    up1 = _convT_ref(out_block2, p["up_layer1"])
    bridge1 = _conv_ref(out_block1, p["conv_bridge1"], relu=False)
    cat1 = jnp.concatenate([up1, bridge1], axis=-1)
    out_up1 = double_conv(cat1, p["up_block1_conv"]) + conv_bn(cat1, p["up_block1_residual"], False)

    up2 = _convT_ref(out_up1, p["up_layer2"])
    bridge2 = _conv_ref(out_first, p["conv_bridge2"], relu=False)
    cat2 = jnp.concatenate([up2, bridge2], axis=-1)
    out_up2 = double_conv(cat2, p["up_block2_conv"]) + conv_bn(cat2, p["up_block2_residual"], False)

    final = _conv_ref(out_up2, p["conv_final"], relu=False)
    return jnp.transpose(final, (0, 3, 1, 2))


# --------------------------------------------------------------------------
if __name__ == "__main__":
    key = jax.random.PRNGKey(0)
    pkey, xkey = jax.random.split(key)
    params = init_params(pkey)

    N, C_in, H, W = 2, 4, 16, 16
    prepared = prepare_params(params, N=N, H0=H, W0=W)   # one-time re-layout

    # Input matches PyTorch NCHW convention: (batch=2, channels=4, 16, 16)
    x = jax.random.normal(xkey, (N, C_in, H, W), jnp.float32)

    roll_sign = get_roll_sign()          # memoized one-time probe

    run_pallas = jax.jit(lambda xx: unet_forward_pallas(xx, prepared, roll_sign))
    out = jax.block_until_ready(run_pallas(x))

    assert out.shape == (2, 2, 16, 16), out.shape
    assert bool(jnp.all(jnp.isfinite(out)))

    # Cross-check against a pure-JAX reference of the same math.
    ref = jax.block_until_ready(unet_forward_ref(x, params))
    max_err = float(jnp.max(jnp.abs(out - ref)))
    assert max_err < 2e-2, f"mismatch vs reference: {max_err}"

    print("KERNEL_OK")
</pallas_src>

<mosaic_0001>
module attributes {stable_mosaic.version = 11 : i64} {
  func.func @_roll_probe_kernel(%arg0: memref<8x128xf32, #tpu.memory_space<vmem>>, %arg1: memref<8x128xf32, #tpu.memory_space<vmem>>) attributes {dimension_semantics = [], scalar_prefetch = 0 : i64, scratch_operands = 0 : i64, tpu.core_type = #tpu.core_type<tc>} {
    %c0 = arith.constant 0 : index
    %c0_0 = arith.constant 0 : index
    %0 = vector.load %arg0[%c0, %c0_0] : memref<8x128xf32, #tpu.memory_space<vmem>>, vector<8x128xf32>
    %c1_i32 = arith.constant 1 : i32
    %1 = tpu.dynamic_rotate %0 by %c1_i32 dim 1 : vector<8x128xf32>, i32 -> vector<8x128xf32>
    %c0_1 = arith.constant 0 : index
    %c0_2 = arith.constant 0 : index
    %2 = vector.load %arg1[%c0_1, %c0_2] : memref<8x128xf32, #tpu.memory_space<vmem>>, vector<8x128xf32>
    tpu.vector_store %arg1[%c0_1, %c0_2], %1 {strides = array<i32>} : memref<8x128xf32, #tpu.memory_space<vmem>>, vector<8x128xf32>,
    return
  }
}

</mosaic_0001>

<llo_original>
// kernel: tpu_custom_call.1
$region0: #{tpu_custom_call.1}
  #allocation0 [shape = 'u32[]', space=smem, size = 0x4, offset = 0x4, fixed_abs, tag = 'smem constant byte address 0x4 - core index']
  #allocation1 [shape = 'u32[72,128]{1,0:T(1,128)}', space=vmem, size = 0x9000, scoped, tag = 'internal scratch']
  %s0 = inlined_call_operand.hbm [shape: f32[8,128], index: 0, kind: input, shape index: {}]
  %s1 = inlined_call_operand.hbm [shape: f32[8,128], index: 1, kind: output, shape index: {}]
  %s2 = sld [smem:[#allocation0]]
  $region18: #{tpu_custom_call.1} parent=0
    _
  %s4 = ssub.s32 1, %s2
  %s5 = scalar_select 0, %s4, %s2
  $region1: #{tpu_custom_call.1} parent=0
    #allocation2 [shape = 'u8[4096]{0}', space=vmem, size = 0x1000, scoped, tag = 'input window, operand 0, single buffered']
    #allocation3 [shape = 's32[1]{0}', space=sflag, size = 0x4, scoped, tag = 'scoped memory for tpu_custom_call.1']
    #allocation4 [shape = 's32[1]{0}', space=sflag, size = 0x4, scoped, tag = 'scoped memory for tpu_custom_call.1']
    #allocation5 [shape = 'u8[4096]{0}', space=vmem, size = 0x1000, scoped, tag = 'output window, operand 0, single buffered']
    %6 = vsyncpa [#allocation3], 0
    %7 = vsyncpa [#allocation4], 0
    // Predicated region
    $region2: #{tpu_custom_call.1} parent=1 // pred_check
      _
    $region3: #{tpu_custom_call.1} parent=1 // pred_check_branch
      %9 = sbr.rel (0) target = $region5
    $region4: #{tpu_custom_call.1} parent=1 // pred_region
      %11 = vsyncadd [#allocation3], 0
      %s13 = sshll.u32 %s0, 4
      %s14 = int_to_ptr.hbm [resolvable:$true] %s13
      %s15 = sshll.u32 [#allocation2], 4
      %s16 = int_to_ptr.vmem [resolvable:$true] %s15
      %18 = dma.hbm_to_vmem [thread:$0]  %s14, 128, %s16, [#allocation3]
    $region5: #{tpu_custom_call.1} parent=1 // pred_fallthru
      _
    // Predicated region
    $region6: #{tpu_custom_call.1} parent=1 // pred_check
      _
    $region7: #{tpu_custom_call.1} parent=1 // pred_check_branch
      %20 = sbr.rel (0) target = $region9
    $region8: #{tpu_custom_call.1} parent=1 // pred_region
      %22 = dma.done [#allocation3], 128
    $region9: #{tpu_custom_call.1} parent=1 // pred_fallthru
      _
    %v23 = vld [vmem:[#allocation2] sm:$0xff]
    %24 = vrot.lane.b32.xlu0 %v23, 1
    %v25 = vpop.permute.xlu0 %24
    %26 = vst [vmem:[#allocation5] sm:$0xff] %v25
    // Predicated region
    $region10: #{tpu_custom_call.1} parent=1 // pred_check
      _
    $region11: #{tpu_custom_call.1} parent=1 // pred_check_branch
      %28 = sbr.rel (0) target = $region13
    $region12: #{tpu_custom_call.1} parent=1 // pred_region
      %30 = vsyncadd [#allocation4], 0
      %s32 = sshll.u32 [#allocation5], 4
      %s33 = int_to_ptr.vmem [resolvable:$true] %s32
      %s34 = sshll.u32 %s1, 4
      %s35 = int_to_ptr.hbm [resolvable:$true] %s34
      %37 = dma.vmem_to_hbm [thread:$0]  %s33, 128, %s35, [#allocation4]
    $region13: #{tpu_custom_call.1} parent=1 // pred_fallthru
      _
    // Predicated region
    $region14: #{tpu_custom_call.1} parent=1 // pred_check
      _
    $region15: #{tpu_custom_call.1} parent=1 // pred_check_branch
      %39 = sbr.rel (0) target = $region17
    $region16: #{tpu_custom_call.1} parent=1 // pred_region
      %41 = dma.done [#allocation4], 128
    $region17: #{tpu_custom_call.1} parent=1 // pred_fallthru
      _
    %42 = vsyncpa [#allocation3], 1
    %43 = vsyncpa [#allocation4], 1

</llo_original>
